<compile_context>
chip_gen: v6e
topology: v6e:2x2x1
jax: 0.10.0
libtpu: 0.0.40
codegen_flags: <defaults>
</compile_context>

<pallas_src>
import jax
import jax.numpy as jnp
from jax import lax
from jax.experimental import pallas as pl
from jax.experimental.pallas import tpu as pltpu

LANE = 128                      # lane width / output-channel padding
EPS = 1e-5                      # nn.BatchNorm2d default
MATMUL_DTYPE = jnp.bfloat16     # MXU-native on v5e/v6e/v7x; accumulation is f32
STORE_DTYPE = jnp.bfloat16      # inter-pass HBM slabs (c1, c2, shortcut)


def _round_up(v, m):
    return ((v + m - 1) // m) * m


# --------------------------------------------------------------- kernels ----

def conv_stats_kernel(cols_ref, w_ref, out_ref, stats_ref):
    """One dense-K MXU matmul per batch block + exact per-block BN partials.

    cols_ref : (B*R, K)   bf16 im2col slab (zero rows for batch padding)
    w_ref    : (K, Cp)    bf16 packed weight
    out_ref  : (B*R, Cp)  conv output (STORE_DTYPE)
    stats_ref: (1, 2, Cp) f32 per-block [sum, sumsq] of the f32 accumulator
    """
    acc = jnp.dot(cols_ref[...], w_ref[...], preferred_element_type=jnp.float32)
    out_ref[...] = acc.astype(out_ref.dtype)
    s = jnp.sum(acc, axis=0, keepdims=True)
    sq = jnp.sum(acc * acc, axis=0, keepdims=True)
    # TODO(synk): sum/sumsq can lose precision via cancellation for large-mean
    # activations; switch to centered/Welford partials if that ever matters.
    stats_ref[0] = jnp.concatenate([s, sq], axis=0)


def bn_add_relu_kernel(c2_ref, xsc_ref, scale_ref, shift_ref, out_ref):
    """BN2 folded to one FMA + identity shortcut + ReLU, lane-dense stores."""
    out_ref[...] = jnp.maximum(
        c2_ref[...].astype(jnp.float32) * scale_ref[...] + shift_ref[...]
        + xsc_ref[...].astype(jnp.float32), 0.0).astype(out_ref.dtype)


# --------------------------------------------------- wrapper-side helpers ----

def _im2col_dense(x_nhwc):
    """(N,H,W,C) -> (N*H*W, 9*C) dense-K im2col, tap-major / channel-minor."""
    N, H, W, C = x_nhwc.shape
    xp = jnp.pad(x_nhwc, ((0, 0), (1, 1), (1, 1), (0, 0)))
    taps = [xp[:, dy:dy + H, dx:dx + W, :] for dy in range(3) for dx in range(3)]
    return jnp.concatenate(taps, axis=-1).reshape(N * H * W, 9 * C)


def _pack_weight_dense(w, K, Cp):
    """(Cout,Cin,3,3) torch layout -> (K, Cp) dense-K im2col weight (bf16)."""
    Cout, Cin = w.shape[0], w.shape[1]
    wt = jnp.transpose(w, (2, 3, 1, 0)).reshape(9 * Cin, Cout).astype(jnp.float32)
    return jnp.pad(wt, ((0, K - 9 * Cin), (0, Cp - Cout))).astype(MATMUL_DTYPE)


def _fold_bn(stats, gamma_p, beta_p, count):
    """stats: (nblocks, 2, Cp) partial [sum, sumsq] -> per-channel FMA coeffs."""
    tot = jnp.sum(stats, axis=0)
    mean = tot[0] / count
    var = jnp.maximum(tot[1] / count - mean * mean, 0.0)   # biased (train) var
    scale = gamma_p * lax.rsqrt(var + EPS)                 # padded lanes -> 0
    shift = beta_p - mean * scale
    return scale.reshape(1, -1), shift.reshape(1, -1)


def basic_block_forward(x_nchw, w1, g1, b1, w2, g2, b2, *, block_batch=4):
    """x: (N, Cin, H, W); w*: (Cout, Cin, 3, 3). Requires Cin == Cout, stride 1."""
    N, Cin, H, W = x_nchw.shape
    C = w1.shape[0]
    assert Cin == C, "identity shortcut requires in_planes == planes (stride 1)"
    R = H * W
    Cp = _round_up(max(C, Cin), LANE)        # lane-dense output channels
    K1 = _round_up(9 * Cin, LANE)            # dense contraction for conv1
    K2 = _round_up(9 * C, LANE)              # dense contraction for conv2
    count = N * R                            # real elements per channel (BN)

    # Batch blocking: B samples per grid step, capped so >= ~4 grid steps remain
    # (keeps v7x's 2 TensorCores busy and pipelining deep). Batch padded with
    # zero rows; zero cols rows give zero acc rows -> zero stats contribution.
    B = max(1, min(block_batch, N // 4))
    nblocks = -(-N // B)
    Npad = nblocks * B
    assert (B * R) % 8 == 0, "rows per block must be a multiple of 8 (sublanes)"

    f32 = jnp.float32
    x_nhwc = jnp.transpose(x_nchw, (0, 2, 3, 1)).astype(f32)

    def pad_rows(a):
        return jnp.pad(a, ((0, Npad * R - a.shape[0]), (0, 0)))

    # conv1 im2col built in the wrapper: K carries only real channels (9*Cin
    # rounded to 128 lanes) so the MXU contraction has no channel-pad waste.
    cols1 = pad_rows(_im2col_dense(x_nhwc))
    cols1 = jnp.pad(cols1, ((0, 0), (0, K1 - 9 * Cin))).astype(MATMUL_DTYPE)

    # identity shortcut, lane-dense Cp slab, bf16 in HBM
    xsc = pad_rows(
        jnp.pad(x_nhwc, ((0, 0), (0, 0), (0, 0), (0, Cp - Cin))
                ).reshape(N * R, Cp)).astype(STORE_DTYPE)

    w1c = _pack_weight_dense(w1, K1, Cp)
    w2c = _pack_weight_dense(w2, K2, Cp)
    g1p = jnp.pad(g1.astype(f32), (0, Cp - C))
    b1p = jnp.pad(b1.astype(f32), (0, Cp - C))
    g2p = jnp.pad(g2.astype(f32), (0, Cp - C))
    b2p = jnp.pad(b2.astype(f32), (0, Cp - C))

    params = pltpu.CompilerParams(
        dimension_semantics=("parallel",),        # shard batch blocks over TCs
        vmem_limit_bytes=32 * 1024 * 1024)        # per-step footprint is small

    row_spec = pl.BlockSpec((B * R, Cp), lambda i: (i, 0))
    stats_spec = pl.BlockSpec((1, 2, Cp), lambda i: (i, 0, 0))
    vec_spec = pl.BlockSpec((1, Cp), lambda i: (0, 0))

    def conv_pass(cols, wcol, K):
        return pl.pallas_call(
            conv_stats_kernel,
            grid=(nblocks,),
            in_specs=[pl.BlockSpec((B * R, K), lambda i: (i, 0)),
                      pl.BlockSpec((K, Cp), lambda i: (0, 0))],
            out_specs=(row_spec, stats_spec),
            out_shape=(jax.ShapeDtypeStruct((Npad * R, Cp), STORE_DTYPE),
                       jax.ShapeDtypeStruct((nblocks, 2, Cp), f32)),
            compiler_params=params,
        )(cols, wcol)

    # pass 1: conv1 (dense-K bf16 matmul) + exact per-block BN1 partials
    c1, st1 = conv_pass(cols1, w1c, K1)
    scale1, shift1 = _fold_bn(st1, g1p, b1p, count)

    # inter-pass (plain XLA, bandwidth-bound elementwise + gather): BN1 as one
    # FMA + ReLU, then dense-K im2col for conv2. BN stats above came from the
    # f32 accumulator, so only conv2's *inputs* see the bf16 store rounding.
    h1 = jnp.maximum(c1[:N * R].astype(f32) * scale1 + shift1, 0.0)
    cols2 = pad_rows(_im2col_dense(h1[:, :C].reshape(N, H, W, C)))
    cols2 = jnp.pad(cols2, ((0, 0), (0, K2 - 9 * C))).astype(MATMUL_DTYPE)
    # TODO(synk): when 9*C approaches 9*Cp (C >= ~100) move this im2col back
    # in-kernel (bf16 (B*R, 9*Cp) scratch) to avoid the cols2 HBM round trip.

    # pass 2: conv2 + exact per-block BN2 partials
    c2, st2 = conv_pass(cols2, w2c, K2)
    scale2, shift2 = _fold_bn(st2, g2p, b2p, count)

    # pass 3: BN2 FMA + identity shortcut + ReLU (lane-dense, batch-blocked)
    out2d = pl.pallas_call(
        bn_add_relu_kernel,
        grid=(nblocks,),
        in_specs=[row_spec, row_spec, vec_spec, vec_spec],
        out_specs=row_spec,
        out_shape=jax.ShapeDtypeStruct((Npad * R, Cp), x_nchw.dtype),
        compiler_params=params,
    )(c2, xsc, scale2, shift2)

    out = out2d[:N * R].reshape(N, H, W, Cp)[..., :C]
    return jnp.transpose(out, (0, 3, 1, 2))


def reference_forward(x, w1, g1, b1, w2, g2, b2, eps=EPS):
    """Plain-JAX f32 NCHW reference mirroring the PyTorch forward (train BN)."""
    def conv(v, w):
        return lax.conv_general_dilated(
            v, w, (1, 1), ((1, 1), (1, 1)),
            dimension_numbers=('NCHW', 'OIHW', 'NCHW'))

    def bn(v, g, b):
        mean = jnp.mean(v, axis=(0, 2, 3), keepdims=True)
        var = jnp.mean((v - mean) ** 2, axis=(0, 2, 3), keepdims=True)
        return ((v - mean) * lax.rsqrt(var + eps)
                * g[None, :, None, None] + b[None, :, None, None])

    out = jax.nn.relu(bn(conv(x, w1), g1, b1))
    out = bn(conv(out, w2), g2, b2)
    return jax.nn.relu(out + x)


if __name__ == "__main__":
    N, C, H, W = 2, 4, 16, 16   # in_planes == planes == 4, stride = 1
    key = jax.random.PRNGKey(0)
    k = jax.random.split(key, 7)

    x = jax.random.normal(k[0], (N, C, H, W), jnp.float32)
    w1 = 0.2 * jax.random.normal(k[1], (C, C, 3, 3), jnp.float32)
    g1 = 1.0 + 0.1 * jax.random.normal(k[2], (C,), jnp.float32)
    b1 = 0.1 * jax.random.normal(k[3], (C,), jnp.float32)
    w2 = 0.2 * jax.random.normal(k[4], (C, C, 3, 3), jnp.float32)
    g2 = 1.0 + 0.1 * jax.random.normal(k[5], (C,), jnp.float32)
    b2 = 0.1 * jax.random.normal(k[6], (C,), jnp.float32)

    out = jax.block_until_ready(
        jax.jit(basic_block_forward)(x, w1, g1, b1, w2, g2, b2))
    ref = reference_forward(x, w1, g1, b1, w2, g2, b2)

    assert out.shape == (N, C, H, W)
    err = float(jnp.max(jnp.abs(out - ref)))
    # bf16 MXU inputs + bf16 inter-pass slabs vs. a pure-f32 reference: expect
    # a max-abs error of a few 1e-2 on O(1) BN-normalized activations
    # (BN statistics themselves are exact; only rounded tensors propagate).
    assert jnp.allclose(out, ref, rtol=5e-2, atol=5e-2), f"max abs err {err}"
    print("KERNEL_OK")
</pallas_src>

<mosaic_0001>
module attributes {stable_mosaic.version = 11 : i64} {
  func.func @conv_stats_kernel(%arg0: i32, %arg1: memref<256x128xbf16, #tpu.memory_space<vmem>>, %arg2: memref<128x128xbf16, #tpu.memory_space<vmem>>, %arg3: memref<256x128xbf16, #tpu.memory_space<vmem>>, %arg4: memref<1x2x128xf32, #tpu.memory_space<vmem>>) attributes {dimension_semantics = [#tpu.dimension_semantics<parallel>], iteration_bounds = array<i64: 2>, scalar_prefetch = 0 : i64, scratch_operands = 0 : i64, tpu.core_type = #tpu.core_type<tc>, window_params = [{transform_indices = @transform_0, window_bounds = array<i64: 256, 128>}, {pipeline_mode = #tpu.pipeline_mode<synchronous>, transform_indices = @transform_1, window_bounds = array<i64: 128, 128>}, {transform_indices = @transform_2, window_bounds = array<i64: 256, 128>}, {transform_indices = @transform_3, window_bounds = array<i64: 1, 2, 128>}]} {
    %c0 = arith.constant 0 : index
    %c0_0 = arith.constant 0 : index
    %0 = vector.load %arg1[%c0, %c0_0] : memref<256x128xbf16, #tpu.memory_space<vmem>>, vector<256x128xbf16>
    %c0_1 = arith.constant 0 : index
    %c0_2 = arith.constant 0 : index
    %1 = vector.load %arg2[%c0_1, %c0_2] : memref<128x128xbf16, #tpu.memory_space<vmem>>, vector<128x128xbf16>
    %cst = arith.constant dense<0.000000e+00> : vector<256x128xf32>
    %2 = tpu.matmul %0, %1, %cst {dimension_numbers = #tpu.dot_dimension_numbers<[1], [0], [0], [1], [0, 0, 1, 1], [], []>} : vector<256x128xbf16>, vector<128x128xbf16>, vector<256x128xf32> -> vector<256x128xf32>
    %3 = arith.truncf %2 : vector<256x128xf32> to vector<256x128xbf16>
    %c0_3 = arith.constant 0 : index
    %c0_4 = arith.constant 0 : index
    %4 = vector.load %arg3[%c0_3, %c0_4] : memref<256x128xbf16, #tpu.memory_space<vmem>>, vector<256x128xbf16>
    tpu.vector_store %arg3[%c0_3, %c0_4], %3 {strides = array<i32>} : memref<256x128xbf16, #tpu.memory_space<vmem>>, vector<256x128xbf16>,
    %cst_5 = arith.constant dense<0.000000e+00> : vector<128xf32>
    %5 = vector.multi_reduction <add>, %2, %cst_5 [0] : vector<256x128xf32> to vector<128xf32>
    %6 = vector.shape_cast %5 : vector<128xf32> to vector<1x128xf32>
    %7 = arith.mulf %2, %2 : vector<256x128xf32>
    %cst_6 = arith.constant dense<0.000000e+00> : vector<128xf32>
    %8 = vector.multi_reduction <add>, %7, %cst_6 [0] : vector<256x128xf32> to vector<128xf32>
    %9 = vector.shape_cast %8 : vector<128xf32> to vector<1x128xf32>
    %10 = tpu.concatenate %6, %9 in 0 : vector<1x128xf32>, vector<1x128xf32> -> vector<2x128xf32>
    %c0_7 = arith.constant 0 : index
    %c0_8 = arith.constant 0 : index
    %c0_9 = arith.constant 0 : index
    %11 = vector.load %arg4[%c0_7, %c0_8, %c0_9] : memref<1x2x128xf32, #tpu.memory_space<vmem>>, vector<1x2x128xf32>
    %12 = vector.shape_cast %11 : vector<1x2x128xf32> to vector<2x128xf32>
    %13 = vector.shape_cast %10 : vector<2x128xf32> to vector<1x2x128xf32>
    tpu.vector_store %arg4[%c0_7, %c0_8, %c0_9], %13 {strides = array<i32>} : memref<1x2x128xf32, #tpu.memory_space<vmem>>, vector<1x2x128xf32>,
    return
  }
  func.func @transform_0(%arg0: i32) -> (i32, i32) {
    %c0_i32 = arith.constant 0 : i32
    %c0_i32_0 = arith.constant 0 : i32
    return %arg0, %c0_i32 : i32, i32
  }
  func.func @transform_1(%arg0: i32) -> (i32, i32) {
    %c0_i32 = arith.constant 0 : i32
    %c0_i32_0 = arith.constant 0 : i32
    %c0_i32_1 = arith.constant 0 : i32
    return %c0_i32, %c0_i32_0 : i32, i32
  }
  func.func @transform_2(%arg0: i32) -> (i32, i32) {
    %c0_i32 = arith.constant 0 : i32
    %c0_i32_0 = arith.constant 0 : i32
    return %arg0, %c0_i32 : i32, i32
  }
  func.func @transform_3(%arg0: i32) -> (i32, i32, i32) {
    %c0_i32 = arith.constant 0 : i32
    %c0_i32_0 = arith.constant 0 : i32
    %c0_i32_1 = arith.constant 0 : i32
    return %arg0, %c0_i32, %c0_i32_0 : i32, i32, i32
  }
}

module attributes {stable_mosaic.version = 11 : i64} {
  func.func @bn_add_relu_kernel(%arg0: i32, %arg1: memref<256x128xbf16, #tpu.memory_space<vmem>>, %arg2: memref<256x128xbf16, #tpu.memory_space<vmem>>, %arg3: memref<1x128xf32, #tpu.memory_space<vmem>>, %arg4: memref<1x128xf32, #tpu.memory_space<vmem>>, %arg5: memref<256x128xf32, #tpu.memory_space<vmem>>) attributes {dimension_semantics = [#tpu.dimension_semantics<parallel>], iteration_bounds = array<i64: 2>, scalar_prefetch = 0 : i64, scratch_operands = 0 : i64, tpu.core_type = #tpu.core_type<tc>, window_params = [{transform_indices = @transform_0, window_bounds = array<i64: 256, 128>}, {transform_indices = @transform_1, window_bounds = array<i64: 256, 128>}, {pipeline_mode = #tpu.pipeline_mode<synchronous>, transform_indices = @transform_2, window_bounds = array<i64: 1, 128>}, {pipeline_mode = #tpu.pipeline_mode<synchronous>, transform_indices = @transform_3, window_bounds = array<i64: 1, 128>}, {transform_indices = @transform_4, window_bounds = array<i64: 256, 128>}]} {
    %c0 = arith.constant 0 : index
    %c0_0 = arith.constant 0 : index
    %0 = vector.load %arg1[%c0, %c0_0] : memref<256x128xbf16, #tpu.memory_space<vmem>>, vector<256x128xbf16>
    %1 = arith.extf %0 : vector<256x128xbf16> to vector<256x128xf32>
    %c0_1 = arith.constant 0 : index
    %c0_2 = arith.constant 0 : index
    %2 = vector.load %arg3[%c0_1, %c0_2] : memref<1x128xf32, #tpu.memory_space<vmem>>, vector<1x128xf32>
    %3 = vector.broadcast %2 : vector<1x128xf32> to vector<256x128xf32>
    %4 = arith.mulf %1, %3 : vector<256x128xf32>
    %c0_3 = arith.constant 0 : index
    %c0_4 = arith.constant 0 : index
    %5 = vector.load %arg4[%c0_3, %c0_4] : memref<1x128xf32, #tpu.memory_space<vmem>>, vector<1x128xf32>
    %6 = vector.broadcast %5 : vector<1x128xf32> to vector<256x128xf32>
    %7 = arith.addf %4, %6 : vector<256x128xf32>
    %c0_5 = arith.constant 0 : index
    %c0_6 = arith.constant 0 : index
    %8 = vector.load %arg2[%c0_5, %c0_6] : memref<256x128xbf16, #tpu.memory_space<vmem>>, vector<256x128xbf16>
    %9 = arith.extf %8 : vector<256x128xbf16> to vector<256x128xf32>
    %10 = arith.addf %7, %9 : vector<256x128xf32>
    %cst = arith.constant 0.000000e+00 : f32
    %11 = vector.broadcast %cst : f32 to vector<256x128xf32>
    %12 = arith.maximumf %10, %11 : vector<256x128xf32>
    %c0_7 = arith.constant 0 : index
    %c0_8 = arith.constant 0 : index
    %13 = vector.load %arg5[%c0_7, %c0_8] : memref<256x128xf32, #tpu.memory_space<vmem>>, vector<256x128xf32>
    tpu.vector_store %arg5[%c0_7, %c0_8], %12 {strides = array<i32>} : memref<256x128xf32, #tpu.memory_space<vmem>>, vector<256x128xf32>,
    return
  }
  func.func @transform_0(%arg0: i32) -> (i32, i32) {
    %c0_i32 = arith.constant 0 : i32
    %c0_i32_0 = arith.constant 0 : i32
    return %arg0, %c0_i32 : i32, i32
  }
  func.func @transform_1(%arg0: i32) -> (i32, i32) {
    %c0_i32 = arith.constant 0 : i32
    %c0_i32_0 = arith.constant 0 : i32
    return %arg0, %c0_i32 : i32, i32
  }
  func.func @transform_2(%arg0: i32) -> (i32, i32) {
    %c0_i32 = arith.constant 0 : i32
    %c0_i32_0 = arith.constant 0 : i32
    %c0_i32_1 = arith.constant 0 : i32
    return %c0_i32, %c0_i32_0 : i32, i32
  }
  func.func @transform_3(%arg0: i32) -> (i32, i32) {
    %c0_i32 = arith.constant 0 : i32
    %c0_i32_0 = arith.constant 0 : i32
    %c0_i32_1 = arith.constant 0 : i32
    return %c0_i32, %c0_i32_0 : i32, i32
  }
  func.func @transform_4(%arg0: i32) -> (i32, i32) {
    %c0_i32 = arith.constant 0 : i32
    %c0_i32_0 = arith.constant 0 : i32
    return %arg0, %c0_i32 : i32, i32
  }
}

</mosaic_0001>

<llo_original>
// kernel: basic_block_forward.3
$region0: #{basic_block_forward.3}
  #allocation0 [shape = 'u32[]', space=smem, size = 0x4, offset = 0x4, fixed_abs, tag = 'smem constant byte address 0x4 - core index']
  #allocation1 [shape = 'u32[144,128]{1,0:T(1,128)}', space=vmem, size = 0x12000, scoped, tag = 'internal scratch']
  %s0 = inlined_call_operand.vmem [shape: bf16[512,128], index: 0, kind: input, shape index: {}]
  %s1 = inlined_call_operand.vmem [shape: bf16[128,128], index: 1, kind: input, shape index: {}]
  %s2 = inlined_call_operand.vmem [shape: bf16[512,128], index: 2, kind: output, shape index: {0}]
  %s3 = inlined_call_operand.vmem [shape: f32[2,2,128], index: 3, kind: output, shape index: {1}]
  %4 = xla_tuple %s2, %s3
  %s5 = sld [smem:[#allocation0]]
  $region49: #{basic_block_forward.3} parent=0
    _
  %s7 = ssub.s32 1, %s5
  %s8 = scalar_select 0, %s7, %s5
  loop: start=0, step=1, limit=4
  $region2: #{basic_block_forward.3} parent=0 // loop_pre_header
    _
  $region3: #{basic_block_forward.3} parent=0 // loop_header
    %s10 = sphi 0, %s14
    %p11 = scmp.ge.s32.totalorder %s10, 4
    %s20 = sphi 0, %s22
    %s23 = sphi 0, %s20
    %s24 = sphi 0, %s23
    %s40 = sphi 0, %s24
    %s44 = sphi 0, %s44
    %s46 = sphi 0, %s44
    %s47 = sphi 0, %s46
    %s61 = sphi 0, %s47
    %s67 = sphi 0, %s69
    %s70 = sphi 0, %s67
    %s71 = sphi 0, %s70
    %s87 = sphi 0, %s71
    %s93 = sphi 0, %s95
    %s96 = sphi 0, %s93
    %s97 = sphi 0, %s96
    %s113 = sphi 0, %s97
  $region4: #{basic_block_forward.3} parent=0 // loop_header_branch
    %13 = sbr.rel (%p11) target = $region8
  $region5: #{basic_block_forward.3} parent=0 // loop_body
    %s15 = ssub.s32 %s10, 1
    %s16 = ssub.s32 %s10, 2
    %s17 = sadd.s32 %s10, 1
    %s18 = ssub.s32 %s10, %s17
    %p19 = scmp.eq.s32.totalorder %s18, 0
    %s21 = sadd.s32 %s20, 1
    %s22 = scalar_select %p19, %s20, %s21
    %p25 = pneg %p19
    %p26 = scmp.eq.s32.totalorder %s10, 1
    %p27 = por %p25, %p26
    %p28 = scmp.ne.s32.totalorder %s20, %s23
    %p29 = scmp.eq.s32.totalorder %s10, 0
    %p30 = por %p28, %p29
    %p31 = scmp.ne.s32.totalorder %s20, %s23
    %p32 = scmp.eq.s32.totalorder %s15, 1
    %p33 = por %p31, %p32
    %p34 = scmp.ne.s32.totalorder %s23, %s24
    %p35 = scmp.eq.s32.totalorder %s15, 0
    %p36 = por %p34, %p35
    %p37 = scmp.ne.s32.totalorder %s23, %s24
    %p38 = scmp.eq.s32.totalorder %s16, 1
    %p39 = por %p37, %p38
    %p41 = scmp.ne.s32.totalorder %s24, %s40
    %p42 = scmp.eq.s32.totalorder %s16, 0
    %p43 = por %p41, %p42
    %s45 = sadd.s32 %s44, 1
    %p48 = scmp.eq.s32.totalorder %s10, 1
    %p49 = scmp.ne.s32.totalorder %s44, %s46
    %p50 = scmp.eq.s32.totalorder %s10, 0
    %p51 = por %p49, %p50
    %p52 = scmp.ne.s32.totalorder %s44, %s46
    %p53 = scmp.eq.s32.totalorder %s15, 1
    %p54 = por %p52, %p53
    %p55 = scmp.ne.s32.totalorder %s46, %s47
    %p56 = scmp.eq.s32.totalorder %s15, 0
    %p57 = por %p55, %p56
    %p58 = scmp.ne.s32.totalorder %s46, %s47
    %p59 = scmp.eq.s32.totalorder %s16, 1
    %p60 = por %p58, %p59
    %p62 = scmp.ne.s32.totalorder %s47, %s61
    %p63 = scmp.eq.s32.totalorder %s16, 0
    %p64 = por %p62, %p63
    %s65 = ssub.s32 %s10, %s17
    %p66 = scmp.eq.s32.totalorder %s65, 0
    %s68 = sadd.s32 %s67, 1
    %s69 = scalar_select %p66, %s67, %s68
    %p72 = pneg %p66
    %p73 = scmp.eq.s32.totalorder %s10, 1
    %p74 = por %p72, %p73
    %p75 = scmp.ne.s32.totalorder %s67, %s70
    %p76 = scmp.eq.s32.totalorder %s10, 0
    %p77 = por %p75, %p76
    %p78 = scmp.ne.s32.totalorder %s67, %s70
    %p79 = scmp.eq.s32.totalorder %s15, 1
    %p80 = por %p78, %p79
    %p81 = scmp.ne.s32.totalorder %s70, %s71
    %p82 = scmp.eq.s32.totalorder %s15, 0
    %p83 = por %p81, %p82
    %p84 = scmp.ne.s32.totalorder %s70, %s71
    %p85 = scmp.eq.s32.totalorder %s16, 1
    %p86 = por %p84, %p85
    %p88 = scmp.ne.s32.totalorder %s71, %s87
    %p89 = scmp.eq.s32.totalorder %s16, 0
    %p90 = por %p88, %p89
    %s91 = ssub.s32 %s10, %s17
    %p92 = scmp.eq.s32.totalorder %s91, 0
    %s94 = sadd.s32 %s93, 1
    %s95 = scalar_select %p92, %s93, %s94
    %p98 = pneg %p92
    %p99 = scmp.eq.s32.totalorder %s10, 1
    %p100 = por %p98, %p99
    %p101 = scmp.ne.s32.totalorder %s93, %s96
    %p102 = scmp.eq.s32.totalorder %s10, 0
    %p103 = por %p101, %p102
    %p104 = scmp.ne.s32.totalorder %s93, %s96
    %p105 = scmp.eq.s32.totalorder %s15, 1
    %p106 = por %p104, %p105
    %p107 = scmp.ne.s32.totalorder %s96, %s97
    %p108 = scmp.eq.s32.totalorder %s15, 0
    %p109 = por %p107, %p108
    %p110 = scmp.ne.s32.totalorder %s96, %s97
    %p111 = scmp.eq.s32.totalorder %s16, 1
    %p112 = por %p110, %p111
    %p114 = scmp.ne.s32.totalorder %s97, %s113
    %p115 = scmp.eq.s32.totalorder %s16, 0
    %p116 = por %p114, %p115
    %p117 = scmp.le.s32.totalorder 1, %s10
    %p118 = scmp.lt.s32.totalorder %s10, 3
    %p119 = pnand %p117, %p118
    %p120 = pneg %p119
    // Predicated region
    $region9: #{basic_block_forward.3} parent=5 // pred_check
      _
    $region10: #{basic_block_forward.3} parent=5 // pred_check_branch
      %122 = sbr.rel (%p119) target = $region12
    $region11: #{basic_block_forward.3} parent=5 // pred_region
      %s123 = ssub.s32 %s10, 1
      // Predicated region
      $region13: #{basic_block_forward.3} parent=11 // pred_check
        %p124 = pneg %p57
      $region14: #{basic_block_forward.3} parent=11 // pred_check_branch
        %126 = sbr.rel (%p124) target = $region16
      $region15: #{basic_block_forward.3} parent=11 // pred_region
        _
      $region16: #{basic_block_forward.3} parent=11 // pred_fallthru
        _
    $region12: #{basic_block_forward.3} parent=5 // pred_fallthru
      _
    %p127 = scmp.lt.s32.totalorder %s10, 2
    // Predicated region
    $region17: #{basic_block_forward.3} parent=5 // pred_check
      %p128 = pneg %p127
    $region18: #{basic_block_forward.3} parent=5 // pred_check_branch
      %130 = sbr.rel (%p128) target = $region20
    $region19: #{basic_block_forward.3} parent=5 // pred_region
      // Predicated region
      $region21: #{basic_block_forward.3} parent=19 // pred_check
        %p131 = pneg %p30
      $region22: #{basic_block_forward.3} parent=19 // pred_check_branch
        %133 = sbr.rel (%p131) target = $region24
      $region23: #{basic_block_forward.3} parent=19 // pred_region
        %s134 = smul.u32 32, %s10
        %p135 = scmp.lt.s32.totalorder %s134, 63
        %s136 = scalar_select %p135, %s134, 63
        %s137 = smul.addr %s136, 4
        %s138 = scalar_lea.vmem %s0, %s137
        %s139 = smul.u32 32, %s10
      $region24: #{basic_block_forward.3} parent=19 // pred_fallthru
        _
    $region20: #{basic_block_forward.3} parent=5 // pred_fallthru
      _
    %p140 = scmp.le.s32.totalorder 1, %s10
    %p141 = scmp.lt.s32.totalorder %s10, 3
    %p142 = pnand %p140, %p141
    %p143 = pneg %p142
    // Predicated region
    $region25: #{basic_block_forward.3} parent=5 // pred_check
      _
    $region26: #{basic_block_forward.3} parent=5 // pred_check_branch
      %145 = sbr.rel (%p142) target = $region28
    $region27: #{basic_block_forward.3} parent=5 // pred_region
      %s146 = ssub.s32 %s10, 1
      %s147 = smul.u32 32, %s15
      %p148 = scmp.lt.s32.totalorder %s147, 63
      %s149 = scalar_select %p148, %s147, 63
      %s150 = smul.addr %s149, 4
      %s151 = scalar_lea.vmem %s0, %s150
      %p152 = pneg %p36
      %p153 = pneg %p33
      %p154 = pneg %p57
      %p155 = pneg %p54
      %p156 = pneg %p83
      %p157 = pneg %p80
      %s158 = smul.u32 32, %s15
      %p159 = scmp.lt.s32.totalorder %s158, 63
      %s160 = scalar_select %p159, %s158, 63
      %s161 = smul.addr %s160, 4
      %s162 = scalar_lea.vmem %s2, %s161
      %p163 = pneg %p109
      %p164 = pneg %p106
      %p165 = scmp.lt.s32.totalorder %s15, 1
      %s166 = scalar_select %p165, %s15, 1
      %s167 = smul.addr %s166, 2
      %s168 = scalar_lea.vmem %s3, %s167
      %s169 = smul.u32 32, %s15
      %p170 = scmp.lt.s32.totalorder %s169, 63
      %s171 = scalar_select %p170, %s169, 63
      %s172 = smul.addr %s171, 4
      %s173 = scalar_lea.vmem %s0, %s172
      %s174 = smul.u32 32, %s15
      %s175 = smul.u32 32, %s15
      %p176 = scmp.lt.s32.totalorder %s175, 63
      %s177 = scalar_select %p176, %s175, 63
      %s178 = smul.addr %s177, 4
      %s179 = scalar_lea.vmem %s2, %s178
      %s180 = smul.u32 32, %s15
      %p181 = scmp.lt.s32.totalorder %s15, 1
      %s182 = scalar_select %p181, %s15, 1
      %s183 = smul.addr %s182, 2
      %s184 = scalar_lea.vmem %s3, %s183
      %v186 = vld [vmem:[%s173] sm:$0xf]
      %v187 = vld [vmem:[%s173 + $0x4] sm:$0xf]
      %v188 = vld [vmem:[%s173 + $0x8] sm:$0xf]
      %v189 = vld [vmem:[%s173 + $0xc] sm:$0xf]
      %v190 = vld [vmem:[%s173 + $0x10] sm:$0xf]
      %v191 = vld [vmem:[%s173 + $0x14] sm:$0xf]
      %v192 = vld [vmem:[%s173 + $0x18] sm:$0xf]
      %v193 = vld [vmem:[%s173 + $0x1c] sm:$0xf]
      %v194 = vld [vmem:[%s173 + $0x20] sm:$0xf]
      %v195 = vld [vmem:[%s173 + $0x24] sm:$0xf]
      %v196 = vld [vmem:[%s173 + $0x28] sm:$0xf]
      %v197 = vld [vmem:[%s173 + $0x2c] sm:$0xf]
      %v198 = vld [vmem:[%s173 + $0x30] sm:$0xf]
      %v199 = vld [vmem:[%s173 + $0x34] sm:$0xf]
      %v200 = vld [vmem:[%s173 + $0x38] sm:$0xf]
      %v201 = vld [vmem:[%s173 + $0x3c] sm:$0xf]
      %v202 = vld [vmem:[%s173 + $0x40] sm:$0xf]
      %v203 = vld [vmem:[%s173 + $0x44] sm:$0xf]
      %v204 = vld [vmem:[%s173 + $0x48] sm:$0xf]
      %v205 = vld [vmem:[%s173 + $0x4c] sm:$0xf]
      %v206 = vld [vmem:[%s173 + $0x50] sm:$0xf]
      %v207 = vld [vmem:[%s173 + $0x54] sm:$0xf]
      %v208 = vld [vmem:[%s173 + $0x58] sm:$0xf]
      %v209 = vld [vmem:[%s173 + $0x5c] sm:$0xf]
      %v210 = vld [vmem:[%s173 + $0x60] sm:$0xf]
      %v211 = vld [vmem:[%s173 + $0x64] sm:$0xf]
      %v212 = vld [vmem:[%s173 + $0x68] sm:$0xf]
      %v213 = vld [vmem:[%s173 + $0x6c] sm:$0xf]
      %v214 = vld [vmem:[%s173 + $0x70] sm:$0xf]
      %v215 = vld [vmem:[%s173 + $0x74] sm:$0xf]
      %v216 = vld [vmem:[%s173 + $0x78] sm:$0xf]
      %v217 = vld [vmem:[%s173 + $0x7c] sm:$0xf]
      %v218 = vld [vmem:[%s1] sm:$0xf]
      %v219 = vld [vmem:[%s1 + $0x4] sm:$0xf]
      %v220 = vld [vmem:[%s1 + $0x8] sm:$0xf]
      %v221 = vld [vmem:[%s1 + $0xc] sm:$0xf]
      %v222 = vld [vmem:[%s1 + $0x10] sm:$0xf]
      %v223 = vld [vmem:[%s1 + $0x14] sm:$0xf]
      %v224 = vld [vmem:[%s1 + $0x18] sm:$0xf]
      %v225 = vld [vmem:[%s1 + $0x1c] sm:$0xf]
      %v226 = vld [vmem:[%s1 + $0x20] sm:$0xf]
      %v227 = vld [vmem:[%s1 + $0x24] sm:$0xf]
      %v228 = vld [vmem:[%s1 + $0x28] sm:$0xf]
      %v229 = vld [vmem:[%s1 + $0x2c] sm:$0xf]
      %v230 = vld [vmem:[%s1 + $0x30] sm:$0xf]
      %v231 = vld [vmem:[%s1 + $0x34] sm:$0xf]
      %v232 = vld [vmem:[%s1 + $0x38] sm:$0xf]
      %v233 = vld [vmem:[%s1 + $0x3c] sm:$0xf]
      %v266 = vunpack.c.l.b16 %v186
      %v267 = vunpack.c.l.b16 %v187
      %v268 = vunpack.c.l.b16 %v188
      %v269 = vunpack.c.l.b16 %v189
      %v270 = vunpack.c.l.b16 %v190
      %v271 = vunpack.c.l.b16 %v191
      %v272 = vunpack.c.l.b16 %v192
      %v273 = vunpack.c.l.b16 %v193
      %v274 = vunpack.c.l.b16 %v194
      %v275 = vunpack.c.l.b16 %v195
      %v276 = vunpack.c.l.b16 %v196
      %v277 = vunpack.c.l.b16 %v197
      %v278 = vunpack.c.l.b16 %v198
      %v279 = vunpack.c.l.b16 %v199
      %v280 = vunpack.c.l.b16 %v200
      %v281 = vunpack.c.l.b16 %v201
      %v282 = vunpack.c.l.b16 %v202
      %v283 = vunpack.c.l.b16 %v203
      %v284 = vunpack.c.l.b16 %v204
      %v285 = vunpack.c.l.b16 %v205
      %v286 = vunpack.c.l.b16 %v206
      %v287 = vunpack.c.l.b16 %v207
      %v288 = vunpack.c.l.b16 %v208
      %v289 = vunpack.c.l.b16 %v209
      %v290 = vunpack.c.l.b16 %v210
      %v291 = vunpack.c.l.b16 %v211
      %v292 = vunpack.c.l.b16 %v212
      %v293 = vunpack.c.l.b16 %v213
      %v294 = vunpack.c.l.b16 %v214
      %v295 = vunpack.c.l.b16 %v215
      %v296 = vunpack.c.l.b16 %v216
      %v297 = vunpack.c.l.b16 %v217
      %v298 = vpack.c.b16 %v267, %v266
      %v299 = vpack.c.b16 %v269, %v268
      %v300 = vpack.c.b16 %v271, %v270
      %v301 = vpack.c.b16 %v273, %v272
      %v302 = vpack.c.b16 %v275, %v274
      %v303 = vpack.c.b16 %v277, %v276
      %v304 = vpack.c.b16 %v279, %v278
      %v305 = vpack.c.b16 %v281, %v280
      %v306 = vpack.c.b16 %v283, %v282
      %v307 = vpack.c.b16 %v285, %v284
      %v308 = vpack.c.b16 %v287, %v286
      %v309 = vpack.c.b16 %v289, %v288
      %v310 = vpack.c.b16 %v291, %v290
      %v311 = vpack.c.b16 %v293, %v292
      %v312 = vpack.c.b16 %v295, %v294
      %v313 = vpack.c.b16 %v297, %v296
      %v346 = vunpack.c.l.b16 %v218
      %v347 = vunpack.c.l.b16 %v219
      %v348 = vunpack.c.l.b16 %v220
      %v349 = vunpack.c.l.b16 %v221
      %v350 = vunpack.c.l.b16 %v222
      %v351 = vunpack.c.l.b16 %v223
      %v352 = vunpack.c.l.b16 %v224
      %v353 = vunpack.c.l.b16 %v225
      %v354 = vunpack.c.l.b16 %v226
      %v355 = vunpack.c.l.b16 %v227
      %v356 = vunpack.c.l.b16 %v228
      %v357 = vunpack.c.l.b16 %v229
      %v358 = vunpack.c.l.b16 %v230
      %v359 = vunpack.c.l.b16 %v231
      %v360 = vunpack.c.l.b16 %v232
      %v361 = vunpack.c.l.b16 %v233
      %v362 = vpack.c.b16 %v347, %v346
      %v363 = vpack.c.b16 %v349, %v348
      %v364 = vpack.c.b16 %v351, %v350
      %v365 = vpack.c.b16 %v353, %v352
      %v366 = vpack.c.b16 %v355, %v354
      %v367 = vpack.c.b16 %v357, %v356
      %v368 = vpack.c.b16 %v359, %v358
      %v369 = vpack.c.b16 %v361, %v360
      %378 = vmatprep.subr.bf16.mxu0 0
      %379 = vmatpush1.bf16.msra.mxu0 %v369
      %380 = vmatprep.subr.bf16.mxu0 0
      %381 = vmatpush1.bf16.msra.mxu0 %v368
      %382 = vmatprep.subr.bf16.mxu0 0
      %383 = vmatpush1.bf16.msra.mxu0 %v367
      %384 = vmatprep.subr.bf16.mxu0 0
      %385 = vmatpush1.bf16.msra.mxu0 %v366
      %386 = vmatprep.subr.bf16.mxu0 0
      %387 = vmatpush1.bf16.msra.mxu0 %v365
      %388 = vmatprep.subr.bf16.mxu0 0
      %389 = vmatpush1.bf16.msra.mxu0 %v364
      %390 = vmatprep.subr.bf16.mxu0 0
      %391 = vmatpush1.bf16.msra.mxu0 %v363
      %392 = vmatprep.subr.bf16.mxu0 0
      %393 = vmatpush1.bf16.msra.mxu0 %v362
      %394 = vmatprep.subr.bf16.mxu0 0
      %395 = vmatpush2.bf16.msra.mxu0 0
      %396 = vmatprep.subr.bf16.mxu0 0
      %397 = vmatpush2.bf16.msra.mxu0 0
      %398 = vmatprep.subr.bf16.mxu0 0
      %399 = vmatpush2.bf16.msra.mxu0 0
      %400 = vmatprep.subr.bf16.mxu0 0
      %401 = vmatpush2.bf16.msra.mxu0 0
      %402 = vmatprep.subr.bf16.mxu0 0
      %403 = vmatpush2.bf16.msra.mxu0 0
      %404 = vmatprep.subr.bf16.mxu0 0
      %405 = vmatpush2.bf16.msra.mxu0 0
      %406 = vmatprep.subr.bf16.mxu0 0
      %407 = vmatpush2.bf16.msra.mxu0 0
      %408 = vmatprep.subr.bf16.mxu0 0
      %409 = vmatpush2.bf16.msra.mxu0 0
      %410 = vmatprep.mubr.bf16.mxu0 0
      %411 = vmatmul.mubr.bf16.gmra.mxu0 %v298
      %v412 = vpop.f32.mrf.mxu0
      %v413 = vadd.f32 0.0, %v412
      %v414 = vpop.f32.mrf.mxu0
      %v415 = vpop.f32.mrf.mxu0
      %v416 = vadd.f32 0.0, %v415
      %v417 = vpop.f32.mrf.mxu0
      %418 = vmatprep.mubr.bf16.mxu0 0
      %419 = vmatmul.mubr.bf16.gmra.mxu0 %v299
      %v420 = vpop.f32.mrf.mxu0
      %v421 = vadd.f32 0.0, %v420
      %v422 = vpop.f32.mrf.mxu0
      %v423 = vpop.f32.mrf.mxu0
      %v424 = vadd.f32 0.0, %v423
      %v425 = vpop.f32.mrf.mxu0
      %426 = vmatprep.mubr.bf16.mxu0 0
      %427 = vmatmul.mubr.bf16.gmra.mxu0 %v300
      %v428 = vpop.f32.mrf.mxu0
      %v429 = vadd.f32 0.0, %v428
      %v430 = vpop.f32.mrf.mxu0
      %v431 = vpop.f32.mrf.mxu0
      %v432 = vadd.f32 0.0, %v431
      %v433 = vpop.f32.mrf.mxu0
      %434 = vmatprep.mubr.bf16.mxu0 0
      %435 = vmatmul.mubr.bf16.gmra.mxu0 %v301
      %v436 = vpop.f32.mrf.mxu0
      %v437 = vadd.f32 0.0, %v436
      %v438 = vpop.f32.mrf.mxu0
      %v439 = vpop.f32.mrf.mxu0
      %v440 = vadd.f32 0.0, %v439
      %v441 = vpop.f32.mrf.mxu0
      %442 = vmatprep.mubr.bf16.mxu0 0
      %443 = vmatmul.mubr.bf16.gmra.mxu0 %v302
      %v444 = vpop.f32.mrf.mxu0
      %v445 = vadd.f32 0.0, %v444
      %v446 = vpop.f32.mrf.mxu0
      %v447 = vpop.f32.mrf.mxu0
      %v448 = vadd.f32 0.0, %v447
      %v449 = vpop.f32.mrf.mxu0
      %450 = vmatprep.mubr.bf16.mxu0 0
      %451 = vmatmul.mubr.bf16.gmra.mxu0 %v303
      %v452 = vpop.f32.mrf.mxu0
      %v453 = vadd.f32 0.0, %v452
      %v454 = vpop.f32.mrf.mxu0
      %v455 = vpop.f32.mrf.mxu0
      %v456 = vadd.f32 0.0, %v455
      %v457 = vpop.f32.mrf.mxu0
      %458 = vmatprep.mubr.bf16.mxu0 0
      %459 = vmatmul.mubr.bf16.gmra.mxu0 %v304
      %v460 = vpop.f32.mrf.mxu0
      %v461 = vadd.f32 0.0, %v460
      %v462 = vpop.f32.mrf.mxu0
      %v463 = vpop.f32.mrf.mxu0
      %v464 = vadd.f32 0.0, %v463
      %v465 = vpop.f32.mrf.mxu0
      %466 = vmatprep.mubr.bf16.mxu0 0
      %467 = vmatmul.mubr.bf16.gmra.mxu0 %v305
      %v468 = vpop.f32.mrf.mxu0
      %v469 = vadd.f32 0.0, %v468
      %v470 = vpop.f32.mrf.mxu0
      %v471 = vpop.f32.mrf.mxu0
      %v472 = vadd.f32 0.0, %v471
      %v473 = vpop.f32.mrf.mxu0
      %474 = vmatprep.mubr.bf16.mxu0 0
      %475 = vmatmul.mubr.bf16.gmra.mxu0 %v306
      %v476 = vpop.f32.mrf.mxu0
      %v477 = vadd.f32 0.0, %v476
      %v478 = vpop.f32.mrf.mxu0
      %v479 = vpop.f32.mrf.mxu0
      %v480 = vadd.f32 0.0, %v479
      %v481 = vpop.f32.mrf.mxu0
      %482 = vmatprep.mubr.bf16.mxu0 0
      %483 = vmatmul.mubr.bf16.gmra.mxu0 %v307
      %v484 = vpop.f32.mrf.mxu0
      %v485 = vadd.f32 0.0, %v484
      %v486 = vpop.f32.mrf.mxu0
      %v487 = vpop.f32.mrf.mxu0
      %v488 = vadd.f32 0.0, %v487
      %v489 = vpop.f32.mrf.mxu0
      %490 = vmatprep.mubr.bf16.mxu0 0
      %491 = vmatmul.mubr.bf16.gmra.mxu0 %v308
      %v492 = vpop.f32.mrf.mxu0
      %v493 = vadd.f32 0.0, %v492
      %v494 = vpop.f32.mrf.mxu0
      %v495 = vpop.f32.mrf.mxu0
      %v496 = vadd.f32 0.0, %v495
      %v497 = vpop.f32.mrf.mxu0
      %498 = vmatprep.mubr.bf16.mxu0 0
      %499 = vmatmul.mubr.bf16.gmra.mxu0 %v309
      %v500 = vpop.f32.mrf.mxu0
      %v501 = vadd.f32 0.0, %v500
      %v502 = vpop.f32.mrf.mxu0
      %v503 = vpop.f32.mrf.mxu0
      %v504 = vadd.f32 0.0, %v503
      %v505 = vpop.f32.mrf.mxu0
      %506 = vmatprep.mubr.bf16.mxu0 0
      %507 = vmatmul.mubr.bf16.gmra.mxu0 %v310
      %v508 = vpop.f32.mrf.mxu0
      %v509 = vadd.f32 0.0, %v508
      %v510 = vpop.f32.mrf.mxu0
      %v511 = vpop.f32.mrf.mxu0
      %v512 = vadd.f32 0.0, %v511
      %v513 = vpop.f32.mrf.mxu0
      %514 = vmatprep.mubr.bf16.mxu0 0
      %515 = vmatmul.mubr.bf16.gmra.mxu0 %v311
      %v516 = vpop.f32.mrf.mxu0
      %v517 = vadd.f32 0.0, %v516
      %v518 = vpop.f32.mrf.mxu0
      %v519 = vpop.f32.mrf.mxu0
      %v520 = vadd.f32 0.0, %v519
      %v521 = vpop.f32.mrf.mxu0
      %522 = vmatprep.mubr.bf16.mxu0 0
      %523 = vmatmul.mubr.bf16.gmra.mxu0 %v312
      %v524 = vpop.f32.mrf.mxu0
      %v525 = vadd.f32 0.0, %v524
      %v526 = vpop.f32.mrf.mxu0
      %v527 = vpop.f32.mrf.mxu0
      %v528 = vadd.f32 0.0, %v527
      %v529 = vpop.f32.mrf.mxu0
      %530 = vmatprep.mubr.bf16.mxu0 0
      %531 = vmatmul.mubr.bf16.gmra.mxu0 %v313
      %v532 = vpop.f32.mrf.mxu0
      %v533 = vadd.f32 0.0, %v532
      %v534 = vpop.f32.mrf.mxu0
      %v535 = vpop.f32.mrf.mxu0
      %v536 = vadd.f32 0.0, %v535
      %v537 = vpop.f32.mrf.mxu0
      %538 = vdwg.mxu0
      %v539 = vpack.c.bf16 %v416, %v413
      %v540 = vpack.c.bf16 %v424, %v421
      %v541 = vpack.c.bf16 %v432, %v429
      %v542 = vpack.c.bf16 %v440, %v437
      %v543 = vpack.c.bf16 %v448, %v445
      %v544 = vpack.c.bf16 %v456, %v453
      %v545 = vpack.c.bf16 %v464, %v461
      %v546 = vpack.c.bf16 %v472, %v469
      %v547 = vpack.c.bf16 %v480, %v477
      %v548 = vpack.c.bf16 %v488, %v485
      %v549 = vpack.c.bf16 %v496, %v493
      %v550 = vpack.c.bf16 %v504, %v501
      %v551 = vpack.c.bf16 %v512, %v509
      %v552 = vpack.c.bf16 %v520, %v517
      %v553 = vpack.c.bf16 %v528, %v525
      %v554 = vpack.c.bf16 %v536, %v533
      %v571 = vunpack.c.l.b16 %v539
      %v572 = vunpack.c.h.b16 %v539
      %v573 = vunpack.c.l.b16 %v540
      %v574 = vunpack.c.h.b16 %v540
      %v575 = vunpack.c.l.b16 %v541
      %v576 = vunpack.c.h.b16 %v541
      %v577 = vunpack.c.l.b16 %v542
      %v578 = vunpack.c.h.b16 %v542
      %v579 = vunpack.c.l.b16 %v543
      %v580 = vunpack.c.h.b16 %v543
      %v581 = vunpack.c.l.b16 %v544
      %v582 = vunpack.c.h.b16 %v544
      %v583 = vunpack.c.l.b16 %v545
      %v584 = vunpack.c.h.b16 %v545
      %v585 = vunpack.c.l.b16 %v546
      %v586 = vunpack.c.h.b16 %v546
      %v587 = vunpack.c.l.b16 %v547
      %v588 = vunpack.c.h.b16 %v547
      %v589 = vunpack.c.l.b16 %v548
      %v590 = vunpack.c.h.b16 %v548
      %v591 = vunpack.c.l.b16 %v549
      %v592 = vunpack.c.h.b16 %v549
      %v593 = vunpack.c.l.b16 %v550
      %v594 = vunpack.c.h.b16 %v550
      %v595 = vunpack.c.l.b16 %v551
      %v596 = vunpack.c.h.b16 %v551
      %v597 = vunpack.c.l.b16 %v552
      %v598 = vunpack.c.h.b16 %v552
      %v599 = vunpack.c.l.b16 %v553
      %v600 = vunpack.c.h.b16 %v553
      %v601 = vunpack.c.l.b16 %v554
      %v602 = vunpack.c.h.b16 %v554
      %v603 = vpack.c.b16 %v571, %v571
      %v604 = vpack.c.b16 %v572, %v572
      %v605 = vpack.c.b16 %v573, %v573
      %v606 = vpack.c.b16 %v574, %v574
      %v607 = vpack.c.b16 %v575, %v575
      %v608 = vpack.c.b16 %v576, %v576
      %v609 = vpack.c.b16 %v577, %v577
      %v610 = vpack.c.b16 %v578, %v578
      %v611 = vpack.c.b16 %v579, %v579
      %v612 = vpack.c.b16 %v580, %v580
      %v613 = vpack.c.b16 %v581, %v581
      %v614 = vpack.c.b16 %v582, %v582
      %v615 = vpack.c.b16 %v583, %v583
      %v616 = vpack.c.b16 %v584, %v584
      %v617 = vpack.c.b16 %v585, %v585
      %v618 = vpack.c.b16 %v586, %v586
      %v619 = vpack.c.b16 %v587, %v587
      %v620 = vpack.c.b16 %v588, %v588
      %v621 = vpack.c.b16 %v589, %v589
      %v622 = vpack.c.b16 %v590, %v590
      %v623 = vpack.c.b16 %v591, %v591
      %v624 = vpack.c.b16 %v592, %v592
      %v625 = vpack.c.b16 %v593, %v593
      %v626 = vpack.c.b16 %v594, %v594
      %v627 = vpack.c.b16 %v595, %v595
      %v628 = vpack.c.b16 %v596, %v596
      %v629 = vpack.c.b16 %v597, %v597
      %v630 = vpack.c.b16 %v598, %v598
      %v631 = vpack.c.b16 %v599, %v599
      %v632 = vpack.c.b16 %v600, %v600
      %v633 = vpack.c.b16 %v601, %v601
      %v634 = vpack.c.b16 %v602, %v602
      %667 = vst [vmem:[%s179] sm:$0xf] %v603
      %668 = vst [vmem:[%s179 + $0x4] sm:$0xf] %v604
      %669 = vst [vmem:[%s179 + $0x8] sm:$0xf] %v605
      %670 = vst [vmem:[%s179 + $0xc] sm:$0xf] %v606
      %671 = vst [vmem:[%s179 + $0x10] sm:$0xf] %v607
      %672 = vst [vmem:[%s179 + $0x14] sm:$0xf] %v608
      %673 = vst [vmem:[%s179 + $0x18] sm:$0xf] %v609
      %674 = vst [vmem:[%s179 + $0x1c] sm:$0xf] %v610
      %675 = vst [vmem:[%s179 + $0x20] sm:$0xf] %v611
      %676 = vst [vmem:[%s179 + $0x24] sm:$0xf] %v612
      %677 = vst [vmem:[%s179 + $0x28] sm:$0xf] %v613
      %678 = vst [vmem:[%s179 + $0x2c] sm:$0xf] %v614
      %679 = vst [vmem:[%s179 + $0x30] sm:$0xf] %v615
      %680 = vst [vmem:[%s179 + $0x34] sm:$0xf] %v616
      %681 = vst [vmem:[%s179 + $0x38] sm:$0xf] %v617
      %682 = vst [vmem:[%s179 + $0x3c] sm:$0xf] %v618
      %683 = vst [vmem:[%s179 + $0x40] sm:$0xf] %v619
      %684 = vst [vmem:[%s179 + $0x44] sm:$0xf] %v620
      %685 = vst [vmem:[%s179 + $0x48] sm:$0xf] %v621
      %686 = vst [vmem:[%s179 + $0x4c] sm:$0xf] %v622
      %687 = vst [vmem:[%s179 + $0x50] sm:$0xf] %v623
      %688 = vst [vmem:[%s179 + $0x54] sm:$0xf] %v624
      %689 = vst [vmem:[%s179 + $0x58] sm:$0xf] %v625
      %690 = vst [vmem:[%s179 + $0x5c] sm:$0xf] %v626
      %691 = vst [vmem:[%s179 + $0x60] sm:$0xf] %v627
      %692 = vst [vmem:[%s179 + $0x64] sm:$0xf] %v628
      %693 = vst [vmem:[%s179 + $0x68] sm:$0xf] %v629
      %694 = vst [vmem:[%s179 + $0x6c] sm:$0xf] %v630
      %695 = vst [vmem:[%s179 + $0x70] sm:$0xf] %v631
      %696 = vst [vmem:[%s179 + $0x74] sm:$0xf] %v632
      %697 = vst [vmem:[%s179 + $0x78] sm:$0xf] %v633
      %698 = vst [vmem:[%s179 + $0x7c] sm:$0xf] %v634
      %v699 = vadd.f32 %v413, %v416
      %v700 = vadd.f32 %v699, %v421
      %v701 = vadd.f32 %v700, %v424
      %v702 = vadd.f32 %v701, %v429
      %v703 = vadd.f32 %v702, %v432
      %v704 = vadd.f32 %v703, %v437
      %v705 = vadd.f32 %v704, %v440
      %v706 = vadd.f32 %v705, %v445
      %v707 = vadd.f32 %v706, %v448
      %v708 = vadd.f32 %v707, %v453
      %v709 = vadd.f32 %v708, %v456
      %v710 = vadd.f32 %v709, %v461
      %v711 = vadd.f32 %v710, %v464
      %v712 = vadd.f32 %v711, %v469
      %v713 = vadd.f32 %v712, %v472
      %v714 = vadd.f32 %v713, %v477
      %v715 = vadd.f32 %v714, %v480
      %v716 = vadd.f32 %v715, %v485
      %v717 = vadd.f32 %v716, %v488
      %v718 = vadd.f32 %v717, %v493
      %v719 = vadd.f32 %v718, %v496
      %v720 = vadd.f32 %v719, %v501
      %v721 = vadd.f32 %v720, %v504
      %v722 = vadd.f32 %v721, %v509
      %v723 = vadd.f32 %v722, %v512
      %v724 = vadd.f32 %v723, %v517
      %v725 = vadd.f32 %v724, %v520
      %v726 = vadd.f32 %v725, %v525
      %v727 = vadd.f32 %v726, %v528
      %v728 = vadd.f32 %v727, %v533
      %v729 = vadd.f32 %v728, %v536
      %v730 = vrot.slane %v729, 4
      %v731 = vadd.f32 %v729, %v730
      %v732 = vrot.slane %v731, 2
      %v733 = vadd.f32 %v731, %v732
      %v734 = vrot.slane %v733, 1
      %v735 = vadd.f32 %v733, %v734
      %v736 = vmul.f32 %v413, %v413
      %v737 = vmul.f32 %v416, %v416
      %v738 = vmul.f32 %v421, %v421
      %v739 = vmul.f32 %v424, %v424
      %v740 = vmul.f32 %v429, %v429
      %v741 = vmul.f32 %v432, %v432
      %v742 = vmul.f32 %v437, %v437
      %v743 = vmul.f32 %v440, %v440
      %v744 = vmul.f32 %v445, %v445
      %v745 = vmul.f32 %v448, %v448
      %v746 = vmul.f32 %v453, %v453
      %v747 = vmul.f32 %v456, %v456
      %v748 = vmul.f32 %v461, %v461
      %v749 = vmul.f32 %v464, %v464
      %v750 = vmul.f32 %v469, %v469
      %v751 = vmul.f32 %v472, %v472
      %v752 = vmul.f32 %v477, %v477
      %v753 = vmul.f32 %v480, %v480
      %v754 = vmul.f32 %v485, %v485
      %v755 = vmul.f32 %v488, %v488
      %v756 = vmul.f32 %v493, %v493
      %v757 = vmul.f32 %v496, %v496
      %v758 = vmul.f32 %v501, %v501
      %v759 = vmul.f32 %v504, %v504
      %v760 = vmul.f32 %v509, %v509
      %v761 = vmul.f32 %v512, %v512
      %v762 = vmul.f32 %v517, %v517
      %v763 = vmul.f32 %v520, %v520
      %v764 = vmul.f32 %v525, %v525
      %v765 = vmul.f32 %v528, %v528
      %v766 = vmul.f32 %v533, %v533
      %v767 = vmul.f32 %v536, %v536
      %v768 = vadd.f32 %v736, %v737
      %v769 = vadd.f32 %v768, %v738
      %v770 = vadd.f32 %v769, %v739
      %v771 = vadd.f32 %v770, %v740
      %v772 = vadd.f32 %v771, %v741
      %v773 = vadd.f32 %v772, %v742
      %v774 = vadd.f32 %v773, %v743
      %v775 = vadd.f32 %v774, %v744
      %v776 = vadd.f32 %v775, %v745
      %v777 = vadd.f32 %v776, %v746
      %v778 = vadd.f32 %v777, %v747
      %v779 = vadd.f32 %v778, %v748
      %v780 = vadd.f32 %v779, %v749
      %v781 = vadd.f32 %v780, %v750
      %v782 = vadd.f32 %v781, %v751
      %v783 = vadd.f32 %v782, %v752
      %v784 = vadd.f32 %v783, %v753
      %v785 = vadd.f32 %v784, %v754
      %v786 = vadd.f32 %v785, %v755
      %v787 = vadd.f32 %v786, %v756
      %v788 = vadd.f32 %v787, %v757
      %v789 = vadd.f32 %v788, %v758
      %v790 = vadd.f32 %v789, %v759
      %v791 = vadd.f32 %v790, %v760
      %v792 = vadd.f32 %v791, %v761
      %v793 = vadd.f32 %v792, %v762
      %v794 = vadd.f32 %v793, %v763
      %v795 = vadd.f32 %v794, %v764
      %v796 = vadd.f32 %v795, %v765
      %v797 = vadd.f32 %v796, %v766
      %v798 = vadd.f32 %v797, %v767
      %v799 = vrot.slane %v798, 4
      %v800 = vadd.f32 %v798, %v799
      %v801 = vrot.slane %v800, 2
      %v802 = vadd.f32 %v800, %v801
      %v803 = vrot.slane %v802, 1
      %v804 = vadd.f32 %v802, %v803
      %vm805 = vcmask 1040384
      %v806 = vsel %vm805, %v735, %v804
      %807 = vst [vmem:[%s184] sm:$0x3] %v806
      %s808 = smul.u32 32, %s15
      %p809 = scmp.lt.s32.totalorder %s808, 63
      %s810 = scalar_select %p809, %s808, 63
      %s811 = smul.addr %s810, 4
      %s812 = scalar_lea.vmem %s2, %s811
      %p813 = scmp.lt.s32.totalorder %s15, 1
      %s814 = scalar_select %p813, %s15, 1
      %s815 = smul.addr %s814, 2
      %s816 = scalar_lea.vmem %s3, %s815
      // Predicated region
      $region29: #{basic_block_forward.3} parent=27 // pred_check
        %p817 = pneg %p80
      $region30: #{basic_block_forward.3} parent=27 // pred_check_branch
        %819 = sbr.rel (%p817) target = $region32
      $region31: #{basic_block_forward.3} parent=27 // pred_region
        %s820 = smul.u32 32, %s15
      $region32: #{basic_block_forward.3} parent=27 // pred_fallthru
        _
      // Predicated region
      $region33: #{basic_block_forward.3} parent=27 // pred_check
        %p821 = pneg %p106
      $region34: #{basic_block_forward.3} parent=27 // pred_check_branch
        %823 = sbr.rel (%p821) target = $region36
      $region35: #{basic_block_forward.3} parent=27 // pred_region
        _
      $region36: #{basic_block_forward.3} parent=27 // pred_fallthru
        _
    $region28: #{basic_block_forward.3} parent=5 // pred_fallthru
      _
    %p824 = scmp.le.s32.totalorder 2, %s10
    // Predicated region
    $region37: #{basic_block_forward.3} parent=5 // pred_check
      %p825 = pneg %p824
    $region38: #{basic_block_forward.3} parent=5 // pred_check_branch
      %827 = sbr.rel (%p825) target = $region40
    $region39: #{basic_block_forward.3} parent=5 // pred_region
      %s828 = ssub.s32 %s10, 2
      // Predicated region
      $region41: #{basic_block_forward.3} parent=39 // pred_check
        %p829 = pneg %p86
      $region42: #{basic_block_forward.3} parent=39 // pred_check_branch
        %831 = sbr.rel (%p829) target = $region44
      $region43: #{basic_block_forward.3} parent=39 // pred_region
        %s832 = smul.u32 32, %s16
        %p833 = scmp.lt.s32.totalorder %s832, 63
        %s834 = scalar_select %p833, %s832, 63
        %s835 = smul.addr %s834, 4
        %s836 = scalar_lea.vmem %s2, %s835
      $region44: #{basic_block_forward.3} parent=39 // pred_fallthru
        _
      // Predicated region
      $region45: #{basic_block_forward.3} parent=39 // pred_check
        %p837 = pneg %p112
      $region46: #{basic_block_forward.3} parent=39 // pred_check_branch
        %839 = sbr.rel (%p837) target = $region48
      $region47: #{basic_block_forward.3} parent=39 // pred_region
        %p840 = scmp.lt.s32.totalorder %s16, 1
        %s841 = scalar_select %p840, %s16, 1
        %s842 = smul.addr %s841, 2
        %s843 = scalar_lea.vmem %s3, %s842
      $region48: #{basic_block_forward.3} parent=39 // pred_fallthru
        _
    $region40: #{basic_block_forward.3} parent=5 // pred_fallthru
      _
  $region6: #{basic_block_forward.3} parent=0 // loop_footer
    %s14 = sadd.s32 1, %s10
  $region7: #{basic_block_forward.3} parent=0 // loop_footer_branch
    %9 = sbr.rel target = $region3
  $region8: #{basic_block_forward.3} parent=0 // loop_exit
    _

// kernel: basic_block_forward.5
$region0: #{basic_block_forward.5}
  #allocation0 [shape = 'u32[]', space=smem, size = 0x4, offset = 0x4, fixed_abs, tag = 'smem constant byte address 0x4 - core index']
  #allocation1 [shape = 'u32[144,128]{1,0:T(1,128)}', space=vmem, size = 0x12000, scoped, tag = 'internal scratch']
  %s0 = inlined_call_operand.vmem [shape: bf16[512,128], index: 0, kind: input, shape index: {}]
  %s1 = inlined_call_operand.vmem [shape: bf16[512,128], index: 1, kind: input, shape index: {}]
  %s2 = inlined_call_operand.vmem [shape: f32[1,128], index: 2, kind: input, shape index: {}]
  %s3 = inlined_call_operand.vmem [shape: f32[1,128], index: 3, kind: input, shape index: {}]
  %s4 = inlined_call_operand.vmem [shape: f32[512,128], index: 4, kind: output, shape index: {}]
  %s5 = sld [smem:[#allocation0]]
  $region49: #{basic_block_forward.5} parent=0
    _
  %s7 = ssub.s32 1, %s5
  %s8 = scalar_select 0, %s7, %s5
  loop: start=0, step=1, limit=4
  $region2: #{basic_block_forward.5} parent=0 // loop_pre_header
    _
  $region3: #{basic_block_forward.5} parent=0 // loop_header
    %s10 = sphi 0, %s14
    %p11 = scmp.ge.s32.totalorder %s10, 4
    %s20 = sphi 0, %s22
    %s23 = sphi 0, %s20
    %s24 = sphi 0, %s23
    %s40 = sphi 0, %s24
    %s46 = sphi 0, %s48
    %s49 = sphi 0, %s46
    %s50 = sphi 0, %s49
    %s66 = sphi 0, %s50
    %s70 = sphi 0, %s70
    %s72 = sphi 0, %s70
    %s73 = sphi 0, %s72
    %s87 = sphi 0, %s73
    %s91 = sphi 0, %s91
    %s93 = sphi 0, %s91
    %s94 = sphi 0, %s93
    %s108 = sphi 0, %s94
    %s114 = sphi 0, %s116
    %s117 = sphi 0, %s114
    %s118 = sphi 0, %s117
    %s134 = sphi 0, %s118
  $region4: #{basic_block_forward.5} parent=0 // loop_header_branch
    %13 = sbr.rel (%p11) target = $region8
  $region5: #{basic_block_forward.5} parent=0 // loop_body
    %s15 = ssub.s32 %s10, 1
    %s16 = ssub.s32 %s10, 2
    %s17 = sadd.s32 %s10, 1
    %s18 = ssub.s32 %s10, %s17
    %p19 = scmp.eq.s32.totalorder %s18, 0
    %s21 = sadd.s32 %s20, 1
    %s22 = scalar_select %p19, %s20, %s21
    %p25 = pneg %p19
    %p26 = scmp.eq.s32.totalorder %s10, 1
    %p27 = por %p25, %p26
    %p28 = scmp.ne.s32.totalorder %s20, %s23
    %p29 = scmp.eq.s32.totalorder %s10, 0
    %p30 = por %p28, %p29
    %p31 = scmp.ne.s32.totalorder %s20, %s23
    %p32 = scmp.eq.s32.totalorder %s15, 1
    %p33 = por %p31, %p32
    %p34 = scmp.ne.s32.totalorder %s23, %s24
    %p35 = scmp.eq.s32.totalorder %s15, 0
    %p36 = por %p34, %p35
    %p37 = scmp.ne.s32.totalorder %s23, %s24
    %p38 = scmp.eq.s32.totalorder %s16, 1
    %p39 = por %p37, %p38
    %p41 = scmp.ne.s32.totalorder %s24, %s40
    %p42 = scmp.eq.s32.totalorder %s16, 0
    %p43 = por %p41, %p42
    %s44 = ssub.s32 %s10, %s17
    %p45 = scmp.eq.s32.totalorder %s44, 0
    %s47 = sadd.s32 %s46, 1
    %s48 = scalar_select %p45, %s46, %s47
    %p51 = pneg %p45
    %p52 = scmp.eq.s32.totalorder %s10, 1
    %p53 = por %p51, %p52
    %p54 = scmp.ne.s32.totalorder %s46, %s49
    %p55 = scmp.eq.s32.totalorder %s10, 0
    %p56 = por %p54, %p55
    %p57 = scmp.ne.s32.totalorder %s46, %s49
    %p58 = scmp.eq.s32.totalorder %s15, 1
    %p59 = por %p57, %p58
    %p60 = scmp.ne.s32.totalorder %s49, %s50
    %p61 = scmp.eq.s32.totalorder %s15, 0
    %p62 = por %p60, %p61
    %p63 = scmp.ne.s32.totalorder %s49, %s50
    %p64 = scmp.eq.s32.totalorder %s16, 1
    %p65 = por %p63, %p64
    %p67 = scmp.ne.s32.totalorder %s50, %s66
    %p68 = scmp.eq.s32.totalorder %s16, 0
    %p69 = por %p67, %p68
    %s71 = sadd.s32 %s70, 1
    %p74 = scmp.eq.s32.totalorder %s10, 1
    %p75 = scmp.ne.s32.totalorder %s70, %s72
    %p76 = scmp.eq.s32.totalorder %s10, 0
    %p77 = por %p75, %p76
    %p78 = scmp.ne.s32.totalorder %s70, %s72
    %p79 = scmp.eq.s32.totalorder %s15, 1
    %p80 = por %p78, %p79
    %p81 = scmp.ne.s32.totalorder %s72, %s73
    %p82 = scmp.eq.s32.totalorder %s15, 0
    %p83 = por %p81, %p82
    %p84 = scmp.ne.s32.totalorder %s72, %s73
    %p85 = scmp.eq.s32.totalorder %s16, 1
    %p86 = por %p84, %p85
    %p88 = scmp.ne.s32.totalorder %s73, %s87
    %p89 = scmp.eq.s32.totalorder %s16, 0
    %p90 = por %p88, %p89
    %s92 = sadd.s32 %s91, 1
    %p95 = scmp.eq.s32.totalorder %s10, 1
    %p96 = scmp.ne.s32.totalorder %s91, %s93
    %p97 = scmp.eq.s32.totalorder %s10, 0
    %p98 = por %p96, %p97
    %p99 = scmp.ne.s32.totalorder %s91, %s93
    %p100 = scmp.eq.s32.totalorder %s15, 1
    %p101 = por %p99, %p100
    %p102 = scmp.ne.s32.totalorder %s93, %s94
    %p103 = scmp.eq.s32.totalorder %s15, 0
    %p104 = por %p102, %p103
    %p105 = scmp.ne.s32.totalorder %s93, %s94
    %p106 = scmp.eq.s32.totalorder %s16, 1
    %p107 = por %p105, %p106
    %p109 = scmp.ne.s32.totalorder %s94, %s108
    %p110 = scmp.eq.s32.totalorder %s16, 0
    %p111 = por %p109, %p110
    %s112 = ssub.s32 %s10, %s17
    %p113 = scmp.eq.s32.totalorder %s112, 0
    %s115 = sadd.s32 %s114, 1
    %s116 = scalar_select %p113, %s114, %s115
    %p119 = pneg %p113
    %p120 = scmp.eq.s32.totalorder %s10, 1
    %p121 = por %p119, %p120
    %p122 = scmp.ne.s32.totalorder %s114, %s117
    %p123 = scmp.eq.s32.totalorder %s10, 0
    %p124 = por %p122, %p123
    %p125 = scmp.ne.s32.totalorder %s114, %s117
    %p126 = scmp.eq.s32.totalorder %s15, 1
    %p127 = por %p125, %p126
    %p128 = scmp.ne.s32.totalorder %s117, %s118
    %p129 = scmp.eq.s32.totalorder %s15, 0
    %p130 = por %p128, %p129
    %p131 = scmp.ne.s32.totalorder %s117, %s118
    %p132 = scmp.eq.s32.totalorder %s16, 1
    %p133 = por %p131, %p132
    %p135 = scmp.ne.s32.totalorder %s118, %s134
    %p136 = scmp.eq.s32.totalorder %s16, 0
    %p137 = por %p135, %p136
    %p138 = scmp.le.s32.totalorder 1, %s10
    %p139 = scmp.lt.s32.totalorder %s10, 3
    %p140 = pnand %p138, %p139
    %p141 = pneg %p140
    // Predicated region
    $region9: #{basic_block_forward.5} parent=5 // pred_check
      _
    $region10: #{basic_block_forward.5} parent=5 // pred_check_branch
      %143 = sbr.rel (%p140) target = $region12
    $region11: #{basic_block_forward.5} parent=5 // pred_region
      %s144 = ssub.s32 %s10, 1
      // Predicated region
      $region13: #{basic_block_forward.5} parent=11 // pred_check
        %p145 = pneg %p83
      $region14: #{basic_block_forward.5} parent=11 // pred_check_branch
        %147 = sbr.rel (%p145) target = $region16
      $region15: #{basic_block_forward.5} parent=11 // pred_region
        _
      $region16: #{basic_block_forward.5} parent=11 // pred_fallthru
        _
      // Predicated region
      $region17: #{basic_block_forward.5} parent=11 // pred_check
        %p148 = pneg %p104
      $region18: #{basic_block_forward.5} parent=11 // pred_check_branch
        %150 = sbr.rel (%p148) target = $region20
      $region19: #{basic_block_forward.5} parent=11 // pred_region
        _
      $region20: #{basic_block_forward.5} parent=11 // pred_fallthru
        _
    $region12: #{basic_block_forward.5} parent=5 // pred_fallthru
      _
    %p151 = scmp.lt.s32.totalorder %s10, 2
    // Predicated region
    $region21: #{basic_block_forward.5} parent=5 // pred_check
      %p152 = pneg %p151
    $region22: #{basic_block_forward.5} parent=5 // pred_check_branch
      %154 = sbr.rel (%p152) target = $region24
    $region23: #{basic_block_forward.5} parent=5 // pred_region
      // Predicated region
      $region25: #{basic_block_forward.5} parent=23 // pred_check
        %p155 = pneg %p30
      $region26: #{basic_block_forward.5} parent=23 // pred_check_branch
        %157 = sbr.rel (%p155) target = $region28
      $region27: #{basic_block_forward.5} parent=23 // pred_region
        %s158 = smul.u32 32, %s10
        %p159 = scmp.lt.s32.totalorder %s158, 63
        %s160 = scalar_select %p159, %s158, 63
        %s161 = smul.addr %s160, 4
        %s162 = scalar_lea.vmem %s0, %s161
        %s163 = smul.u32 32, %s10
      $region28: #{basic_block_forward.5} parent=23 // pred_fallthru
        _
      // Predicated region
      $region29: #{basic_block_forward.5} parent=23 // pred_check
        %p164 = pneg %p56
      $region30: #{basic_block_forward.5} parent=23 // pred_check_branch
        %166 = sbr.rel (%p164) target = $region32
      $region31: #{basic_block_forward.5} parent=23 // pred_region
        %s167 = smul.u32 32, %s10
        %p168 = scmp.lt.s32.totalorder %s167, 63
        %s169 = scalar_select %p168, %s167, 63
        %s170 = smul.addr %s169, 4
        %s171 = scalar_lea.vmem %s1, %s170
        %s172 = smul.u32 32, %s10
      $region32: #{basic_block_forward.5} parent=23 // pred_fallthru
        _
    $region24: #{basic_block_forward.5} parent=5 // pred_fallthru
      _
    %p173 = scmp.le.s32.totalorder 1, %s10
    %p174 = scmp.lt.s32.totalorder %s10, 3
    %p175 = pnand %p173, %p174
    %p176 = pneg %p175
    // Predicated region
    $region33: #{basic_block_forward.5} parent=5 // pred_check
      _
    $region34: #{basic_block_forward.5} parent=5 // pred_check_branch
      %178 = sbr.rel (%p175) target = $region36
    $region35: #{basic_block_forward.5} parent=5 // pred_region
      %s179 = ssub.s32 %s10, 1
      %s180 = smul.u32 32, %s15
      %p181 = scmp.lt.s32.totalorder %s180, 63
      %s182 = scalar_select %p181, %s180, 63
      %s183 = smul.addr %s182, 4
      %s184 = scalar_lea.vmem %s0, %s183
      %p185 = pneg %p36
      %p186 = pneg %p33
      %s187 = smul.u32 32, %s15
      %p188 = scmp.lt.s32.totalorder %s187, 63
      %s189 = scalar_select %p188, %s187, 63
      %s190 = smul.addr %s189, 4
      %s191 = scalar_lea.vmem %s1, %s190
      %p192 = pneg %p62
      %p193 = pneg %p59
      %p194 = pneg %p83
      %p195 = pneg %p80
      %p196 = pneg %p104
      %p197 = pneg %p101
      %p198 = pneg %p130
      %p199 = pneg %p127
      %s200 = smul.u32 32, %s15
      %p201 = scmp.lt.s32.totalorder %s200, 63
      %s202 = scalar_select %p201, %s200, 63
      %s203 = smul.addr %s202, 8
      %s204 = scalar_lea.vmem %s4, %s203
      %s205 = smul.u32 32, %s15
      %p206 = scmp.lt.s32.totalorder %s205, 63
      %s207 = scalar_select %p206, %s205, 63
      %s208 = smul.addr %s207, 4
      %s209 = scalar_lea.vmem %s0, %s208
      %s210 = smul.u32 32, %s15
      %s211 = smul.u32 32, %s15
      %p212 = scmp.lt.s32.totalorder %s211, 63
      %s213 = scalar_select %p212, %s211, 63
      %s214 = smul.addr %s213, 4
      %s215 = scalar_lea.vmem %s1, %s214
      %s216 = smul.u32 32, %s15
      %s217 = smul.u32 32, %s15
      %p218 = scmp.lt.s32.totalorder %s217, 63
      %s219 = scalar_select %p218, %s217, 63
      %s220 = smul.addr %s219, 8
      %s221 = scalar_lea.vmem %s4, %s220
      %s222 = smul.u32 32, %s15
      %v223 = vld [vmem:[%s209] sm:$0xf]
      %v224 = vld [vmem:[%s209 + $0x4] sm:$0xf]
      %v225 = vld [vmem:[%s209 + $0x8] sm:$0xf]
      %v226 = vld [vmem:[%s209 + $0xc] sm:$0xf]
      %v227 = vld [vmem:[%s209 + $0x10] sm:$0xf]
      %v228 = vld [vmem:[%s209 + $0x14] sm:$0xf]
      %v229 = vld [vmem:[%s209 + $0x18] sm:$0xf]
      %v230 = vld [vmem:[%s209 + $0x1c] sm:$0xf]
      %v231 = vld [vmem:[%s209 + $0x20] sm:$0xf]
      %v232 = vld [vmem:[%s209 + $0x24] sm:$0xf]
      %v233 = vld [vmem:[%s209 + $0x28] sm:$0xf]
      %v234 = vld [vmem:[%s209 + $0x2c] sm:$0xf]
      %v235 = vld [vmem:[%s209 + $0x30] sm:$0xf]
      %v236 = vld [vmem:[%s209 + $0x34] sm:$0xf]
      %v237 = vld [vmem:[%s209 + $0x38] sm:$0xf]
      %v238 = vld [vmem:[%s209 + $0x3c] sm:$0xf]
      %v239 = vld [vmem:[%s209 + $0x40] sm:$0xf]
      %v240 = vld [vmem:[%s209 + $0x44] sm:$0xf]
      %v241 = vld [vmem:[%s209 + $0x48] sm:$0xf]
      %v242 = vld [vmem:[%s209 + $0x4c] sm:$0xf]
      %v243 = vld [vmem:[%s209 + $0x50] sm:$0xf]
      %v244 = vld [vmem:[%s209 + $0x54] sm:$0xf]
      %v245 = vld [vmem:[%s209 + $0x58] sm:$0xf]
      %v246 = vld [vmem:[%s209 + $0x5c] sm:$0xf]
      %v247 = vld [vmem:[%s209 + $0x60] sm:$0xf]
      %v248 = vld [vmem:[%s209 + $0x64] sm:$0xf]
      %v249 = vld [vmem:[%s209 + $0x68] sm:$0xf]
      %v250 = vld [vmem:[%s209 + $0x6c] sm:$0xf]
      %v251 = vld [vmem:[%s209 + $0x70] sm:$0xf]
      %v252 = vld [vmem:[%s209 + $0x74] sm:$0xf]
      %v253 = vld [vmem:[%s209 + $0x78] sm:$0xf]
      %v254 = vld [vmem:[%s209 + $0x7c] sm:$0xf]
      %v255 = vunpack.c.l.bf16 %v223
      %v256 = vunpack.c.l.bf16 %v224
      %v257 = vunpack.c.l.bf16 %v225
      %v258 = vunpack.c.l.bf16 %v226
      %v259 = vunpack.c.l.bf16 %v227
      %v260 = vunpack.c.l.bf16 %v228
      %v261 = vunpack.c.l.bf16 %v229
      %v262 = vunpack.c.l.bf16 %v230
      %v263 = vunpack.c.l.bf16 %v231
      %v264 = vunpack.c.l.bf16 %v232
      %v265 = vunpack.c.l.bf16 %v233
      %v266 = vunpack.c.l.bf16 %v234
      %v267 = vunpack.c.l.bf16 %v235
      %v268 = vunpack.c.l.bf16 %v236
      %v269 = vunpack.c.l.bf16 %v237
      %v270 = vunpack.c.l.bf16 %v238
      %v271 = vunpack.c.l.bf16 %v239
      %v272 = vunpack.c.l.bf16 %v240
      %v273 = vunpack.c.l.bf16 %v241
      %v274 = vunpack.c.l.bf16 %v242
      %v275 = vunpack.c.l.bf16 %v243
      %v276 = vunpack.c.l.bf16 %v244
      %v277 = vunpack.c.l.bf16 %v245
      %v278 = vunpack.c.l.bf16 %v246
      %v279 = vunpack.c.l.bf16 %v247
      %v280 = vunpack.c.l.bf16 %v248
      %v281 = vunpack.c.l.bf16 %v249
      %v282 = vunpack.c.l.bf16 %v250
      %v283 = vunpack.c.l.bf16 %v251
      %v284 = vunpack.c.l.bf16 %v252
      %v285 = vunpack.c.l.bf16 %v253
      %v286 = vunpack.c.l.bf16 %v254
      %v287 = vld [vmem:[%s2] sm:$0x1]
      %v289 = vlaneseq
      %v290 = vshrl.u32 %v289, 7
      %v291 = vsub.s32 0, %v290
      %v292 = vrot.slane %v287, %v291
      %v294 = vmul.f32 %v255, %v292
      %v295 = vmul.f32 %v256, %v292
      %v296 = vmul.f32 %v257, %v292
      %v297 = vmul.f32 %v258, %v292
      %v298 = vmul.f32 %v259, %v292
      %v299 = vmul.f32 %v260, %v292
      %v300 = vmul.f32 %v261, %v292
      %v301 = vmul.f32 %v262, %v292
      %v302 = vmul.f32 %v263, %v292
      %v303 = vmul.f32 %v264, %v292
      %v304 = vmul.f32 %v265, %v292
      %v305 = vmul.f32 %v266, %v292
      %v306 = vmul.f32 %v267, %v292
      %v307 = vmul.f32 %v268, %v292
      %v308 = vmul.f32 %v269, %v292
      %v309 = vmul.f32 %v270, %v292
      %v310 = vmul.f32 %v271, %v292
      %v311 = vmul.f32 %v272, %v292
      %v312 = vmul.f32 %v273, %v292
      %v313 = vmul.f32 %v274, %v292
      %v314 = vmul.f32 %v275, %v292
      %v315 = vmul.f32 %v276, %v292
      %v316 = vmul.f32 %v277, %v292
      %v317 = vmul.f32 %v278, %v292
      %v318 = vmul.f32 %v279, %v292
      %v319 = vmul.f32 %v280, %v292
      %v320 = vmul.f32 %v281, %v292
      %v321 = vmul.f32 %v282, %v292
      %v322 = vmul.f32 %v283, %v292
      %v323 = vmul.f32 %v284, %v292
      %v324 = vmul.f32 %v285, %v292
      %v325 = vmul.f32 %v286, %v292
      %v326 = vld [vmem:[%s3] sm:$0x1]
      %v328 = vlaneseq
      %v329 = vshrl.u32 %v328, 7
      %v330 = vsub.s32 0, %v329
      %v331 = vrot.slane %v326, %v330
      %v333 = vadd.f32 %v294, %v331
      %v334 = vadd.f32 %v295, %v331
      %v335 = vadd.f32 %v296, %v331
      %v336 = vadd.f32 %v297, %v331
      %v337 = vadd.f32 %v298, %v331
      %v338 = vadd.f32 %v299, %v331
      %v339 = vadd.f32 %v300, %v331
      %v340 = vadd.f32 %v301, %v331
      %v341 = vadd.f32 %v302, %v331
      %v342 = vadd.f32 %v303, %v331
      %v343 = vadd.f32 %v304, %v331
      %v344 = vadd.f32 %v305, %v331
      %v345 = vadd.f32 %v306, %v331
      %v346 = vadd.f32 %v307, %v331
      %v347 = vadd.f32 %v308, %v331
      %v348 = vadd.f32 %v309, %v331
      %v349 = vadd.f32 %v310, %v331
      %v350 = vadd.f32 %v311, %v331
      %v351 = vadd.f32 %v312, %v331
      %v352 = vadd.f32 %v313, %v331
      %v353 = vadd.f32 %v314, %v331
      %v354 = vadd.f32 %v315, %v331
      %v355 = vadd.f32 %v316, %v331
      %v356 = vadd.f32 %v317, %v331
      %v357 = vadd.f32 %v318, %v331
      %v358 = vadd.f32 %v319, %v331
      %v359 = vadd.f32 %v320, %v331
      %v360 = vadd.f32 %v321, %v331
      %v361 = vadd.f32 %v322, %v331
      %v362 = vadd.f32 %v323, %v331
      %v363 = vadd.f32 %v324, %v331
      %v364 = vadd.f32 %v325, %v331
      %v365 = vld [vmem:[%s215] sm:$0xf]
      %v366 = vld [vmem:[%s215 + $0x4] sm:$0xf]
      %v367 = vld [vmem:[%s215 + $0x8] sm:$0xf]
      %v368 = vld [vmem:[%s215 + $0xc] sm:$0xf]
      %v369 = vld [vmem:[%s215 + $0x10] sm:$0xf]
      %v370 = vld [vmem:[%s215 + $0x14] sm:$0xf]
      %v371 = vld [vmem:[%s215 + $0x18] sm:$0xf]
      %v372 = vld [vmem:[%s215 + $0x1c] sm:$0xf]
      %v373 = vld [vmem:[%s215 + $0x20] sm:$0xf]
      %v374 = vld [vmem:[%s215 + $0x24] sm:$0xf]
      %v375 = vld [vmem:[%s215 + $0x28] sm:$0xf]
      %v376 = vld [vmem:[%s215 + $0x2c] sm:$0xf]
      %v377 = vld [vmem:[%s215 + $0x30] sm:$0xf]
      %v378 = vld [vmem:[%s215 + $0x34] sm:$0xf]
      %v379 = vld [vmem:[%s215 + $0x38] sm:$0xf]
      %v380 = vld [vmem:[%s215 + $0x3c] sm:$0xf]
      %v381 = vld [vmem:[%s215 + $0x40] sm:$0xf]
      %v382 = vld [vmem:[%s215 + $0x44] sm:$0xf]
      %v383 = vld [vmem:[%s215 + $0x48] sm:$0xf]
      %v384 = vld [vmem:[%s215 + $0x4c] sm:$0xf]
      %v385 = vld [vmem:[%s215 + $0x50] sm:$0xf]
      %v386 = vld [vmem:[%s215 + $0x54] sm:$0xf]
      %v387 = vld [vmem:[%s215 + $0x58] sm:$0xf]
      %v388 = vld [vmem:[%s215 + $0x5c] sm:$0xf]
      %v389 = vld [vmem:[%s215 + $0x60] sm:$0xf]
      %v390 = vld [vmem:[%s215 + $0x64] sm:$0xf]
      %v391 = vld [vmem:[%s215 + $0x68] sm:$0xf]
      %v392 = vld [vmem:[%s215 + $0x6c] sm:$0xf]
      %v393 = vld [vmem:[%s215 + $0x70] sm:$0xf]
      %v394 = vld [vmem:[%s215 + $0x74] sm:$0xf]
      %v395 = vld [vmem:[%s215 + $0x78] sm:$0xf]
      %v396 = vld [vmem:[%s215 + $0x7c] sm:$0xf]
      %v397 = vunpack.c.l.bf16 %v365
      %v398 = vunpack.c.l.bf16 %v366
      %v399 = vunpack.c.l.bf16 %v367
      %v400 = vunpack.c.l.bf16 %v368
      %v401 = vunpack.c.l.bf16 %v369
      %v402 = vunpack.c.l.bf16 %v370
      %v403 = vunpack.c.l.bf16 %v371
      %v404 = vunpack.c.l.bf16 %v372
      %v405 = vunpack.c.l.bf16 %v373
      %v406 = vunpack.c.l.bf16 %v374
      %v407 = vunpack.c.l.bf16 %v375
      %v408 = vunpack.c.l.bf16 %v376
      %v409 = vunpack.c.l.bf16 %v377
      %v410 = vunpack.c.l.bf16 %v378
      %v411 = vunpack.c.l.bf16 %v379
      %v412 = vunpack.c.l.bf16 %v380
      %v413 = vunpack.c.l.bf16 %v381
      %v414 = vunpack.c.l.bf16 %v382
      %v415 = vunpack.c.l.bf16 %v383
      %v416 = vunpack.c.l.bf16 %v384
      %v417 = vunpack.c.l.bf16 %v385
      %v418 = vunpack.c.l.bf16 %v386
      %v419 = vunpack.c.l.bf16 %v387
      %v420 = vunpack.c.l.bf16 %v388
      %v421 = vunpack.c.l.bf16 %v389
      %v422 = vunpack.c.l.bf16 %v390
      %v423 = vunpack.c.l.bf16 %v391
      %v424 = vunpack.c.l.bf16 %v392
      %v425 = vunpack.c.l.bf16 %v393
      %v426 = vunpack.c.l.bf16 %v394
      %v427 = vunpack.c.l.bf16 %v395
      %v428 = vunpack.c.l.bf16 %v396
      %v429 = vadd.f32 %v333, %v397
      %v430 = vadd.f32 %v334, %v398
      %v431 = vadd.f32 %v335, %v399
      %v432 = vadd.f32 %v336, %v400
      %v433 = vadd.f32 %v337, %v401
      %v434 = vadd.f32 %v338, %v402
      %v435 = vadd.f32 %v339, %v403
      %v436 = vadd.f32 %v340, %v404
      %v437 = vadd.f32 %v341, %v405
      %v438 = vadd.f32 %v342, %v406
      %v439 = vadd.f32 %v343, %v407
      %v440 = vadd.f32 %v344, %v408
      %v441 = vadd.f32 %v345, %v409
      %v442 = vadd.f32 %v346, %v410
      %v443 = vadd.f32 %v347, %v411
      %v444 = vadd.f32 %v348, %v412
      %v445 = vadd.f32 %v349, %v413
      %v446 = vadd.f32 %v350, %v414
      %v447 = vadd.f32 %v351, %v415
      %v448 = vadd.f32 %v352, %v416
      %v449 = vadd.f32 %v353, %v417
      %v450 = vadd.f32 %v354, %v418
      %v451 = vadd.f32 %v355, %v419
      %v452 = vadd.f32 %v356, %v420
      %v453 = vadd.f32 %v357, %v421
      %v454 = vadd.f32 %v358, %v422
      %v455 = vadd.f32 %v359, %v423
      %v456 = vadd.f32 %v360, %v424
      %v457 = vadd.f32 %v361, %v425
      %v458 = vadd.f32 %v362, %v426
      %v459 = vadd.f32 %v363, %v427
      %v460 = vadd.f32 %v364, %v428
      %v461 = vmax.f32 %v429, 0.0
      %v462 = vmax.f32 %v430, 0.0
      %v463 = vmax.f32 %v431, 0.0
      %v464 = vmax.f32 %v432, 0.0
      %v465 = vmax.f32 %v433, 0.0
      %v466 = vmax.f32 %v434, 0.0
      %v467 = vmax.f32 %v435, 0.0
      %v468 = vmax.f32 %v436, 0.0
      %v469 = vmax.f32 %v437, 0.0
      %v470 = vmax.f32 %v438, 0.0
      %v471 = vmax.f32 %v439, 0.0
      %v472 = vmax.f32 %v440, 0.0
      %v473 = vmax.f32 %v441, 0.0
      %v474 = vmax.f32 %v442, 0.0
      %v475 = vmax.f32 %v443, 0.0
      %v476 = vmax.f32 %v444, 0.0
      %v477 = vmax.f32 %v445, 0.0
      %v478 = vmax.f32 %v446, 0.0
      %v479 = vmax.f32 %v447, 0.0
      %v480 = vmax.f32 %v448, 0.0
      %v481 = vmax.f32 %v449, 0.0
      %v482 = vmax.f32 %v450, 0.0
      %v483 = vmax.f32 %v451, 0.0
      %v484 = vmax.f32 %v452, 0.0
      %v485 = vmax.f32 %v453, 0.0
      %v486 = vmax.f32 %v454, 0.0
      %v487 = vmax.f32 %v455, 0.0
      %v488 = vmax.f32 %v456, 0.0
      %v489 = vmax.f32 %v457, 0.0
      %v490 = vmax.f32 %v458, 0.0
      %v491 = vmax.f32 %v459, 0.0
      %v492 = vmax.f32 %v460, 0.0
      %493 = vst [vmem:[%s221] sm:$0xff] %v461
      %494 = vst [vmem:[%s221 + $0x8] sm:$0xff] %v462
      %495 = vst [vmem:[%s221 + $0x10] sm:$0xff] %v463
      %496 = vst [vmem:[%s221 + $0x18] sm:$0xff] %v464
      %497 = vst [vmem:[%s221 + $0x20] sm:$0xff] %v465
      %498 = vst [vmem:[%s221 + $0x28] sm:$0xff] %v466
      %499 = vst [vmem:[%s221 + $0x30] sm:$0xff] %v467
      %500 = vst [vmem:[%s221 + $0x38] sm:$0xff] %v468
      %501 = vst [vmem:[%s221 + $0x40] sm:$0xff] %v469
      %502 = vst [vmem:[%s221 + $0x48] sm:$0xff] %v470
      %503 = vst [vmem:[%s221 + $0x50] sm:$0xff] %v471
      %504 = vst [vmem:[%s221 + $0x58] sm:$0xff] %v472
      %505 = vst [vmem:[%s221 + $0x60] sm:$0xff] %v473
      %506 = vst [vmem:[%s221 + $0x68] sm:$0xff] %v474
      %507 = vst [vmem:[%s221 + $0x70] sm:$0xff] %v475
      %508 = vst [vmem:[%s221 + $0x78] sm:$0xff] %v476
      %509 = vst [vmem:[%s221 + $0x80] sm:$0xff] %v477
      %510 = vst [vmem:[%s221 + $0x88] sm:$0xff] %v478
      %511 = vst [vmem:[%s221 + $0x90] sm:$0xff] %v479
      %512 = vst [vmem:[%s221 + $0x98] sm:$0xff] %v480
      %513 = vst [vmem:[%s221 + $0xa0] sm:$0xff] %v481
      %514 = vst [vmem:[%s221 + $0xa8] sm:$0xff] %v482
      %515 = vst [vmem:[%s221 + $0xb0] sm:$0xff] %v483
      %516 = vst [vmem:[%s221 + $0xb8] sm:$0xff] %v484
      %517 = vst [vmem:[%s221 + $0xc0] sm:$0xff] %v485
      %518 = vst [vmem:[%s221 + $0xc8] sm:$0xff] %v486
      %519 = vst [vmem:[%s221 + $0xd0] sm:$0xff] %v487
      %520 = vst [vmem:[%s221 + $0xd8] sm:$0xff] %v488
      %521 = vst [vmem:[%s221 + $0xe0] sm:$0xff] %v489
      %522 = vst [vmem:[%s221 + $0xe8] sm:$0xff] %v490
      %523 = vst [vmem:[%s221 + $0xf0] sm:$0xff] %v491
      %524 = vst [vmem:[%s221 + $0xf8] sm:$0xff] %v492
      %s525 = smul.u32 32, %s15
      %p526 = scmp.lt.s32.totalorder %s525, 63
      %s527 = scalar_select %p526, %s525, 63
      %s528 = smul.addr %s527, 8
      %s529 = scalar_lea.vmem %s4, %s528
      // Predicated region
      $region37: #{basic_block_forward.5} parent=35 // pred_check
        %p530 = pneg %p127
      $region38: #{basic_block_forward.5} parent=35 // pred_check_branch
        %532 = sbr.rel (%p530) target = $region40
      $region39: #{basic_block_forward.5} parent=35 // pred_region
        %s533 = smul.u32 32, %s15
      $region40: #{basic_block_forward.5} parent=35 // pred_fallthru
        _
    $region36: #{basic_block_forward.5} parent=5 // pred_fallthru
      _
    %p534 = scmp.le.s32.totalorder 2, %s10
    // Predicated region
    $region41: #{basic_block_forward.5} parent=5 // pred_check
      %p535 = pneg %p534
    $region42: #{basic_block_forward.5} parent=5 // pred_check_branch
      %537 = sbr.rel (%p535) target = $region44
    $region43: #{basic_block_forward.5} parent=5 // pred_region
      %s538 = ssub.s32 %s10, 2
      // Predicated region
      $region45: #{basic_block_forward.5} parent=43 // pred_check
        %p539 = pneg %p133
      $region46: #{basic_block_forward.5} parent=43 // pred_check_branch
        %541 = sbr.rel (%p539) target = $region48
      $region47: #{basic_block_forward.5} parent=43 // pred_region
        %s542 = smul.u32 32, %s16
        %p543 = scmp.lt.s32.totalorder %s542, 63
        %s544 = scalar_select %p543, %s542, 63
        %s545 = smul.addr %s544, 8
        %s546 = scalar_lea.vmem %s4, %s545
      $region48: #{basic_block_forward.5} parent=43 // pred_fallthru
        _
    $region44: #{basic_block_forward.5} parent=5 // pred_fallthru
      _
  $region6: #{basic_block_forward.5} parent=0 // loop_footer
    %s14 = sadd.s32 1, %s10
  $region7: #{basic_block_forward.5} parent=0 // loop_footer_branch
    %9 = sbr.rel target = $region3
  $region8: #{basic_block_forward.5} parent=0 // loop_exit
    _

</llo_original>
